<compile_context>
chip_gen: v6e
topology: v6e:2x2x1
jax: 0.10.0
libtpu: 0.0.40
codegen_flags: <defaults>
</compile_context>

<pallas_src>
import functools

import jax
import jax.numpy as jnp
from jax.experimental import pallas as pl
from jax.experimental.pallas import tpu as pltpu


# ---------------------------------------------------------------------------
# VMEM budgeting / tile selection
# ---------------------------------------------------------------------------

def _round_up(x, m):
    return ((x + m - 1) // m) * m


def _vmem_capacity_bytes():
    try:
        return int(pltpu.get_tpu_info().vmem_capacity_bytes)
    except Exception:
        # Conservative fallback: v7x per-TensorCore VMEM.
        return 64 << 20


def _vmem_limit_bytes():
    cap = _vmem_capacity_bytes()
    # Leave headroom for compiler-internal scratch; never ask for > 100 MiB.
    return min(int(cap * 0.85), 100 << 20)


def _auto_tiles(BT, H, V, itemsize):
    """Pick (tm, tv) that keep the kernel MXU-bound while fitting VMEM.

    HBM traffic for the [V, H] weight is ~ V*H*itemsize*ceil(BT/tm), so tm is
    the main roofline lever (tm ~ 768 keeps bytes/flop under the v6e/v7x
    ridge for bf16).  tv amortizes per-grid-step overhead and prefers
    divisors of V so the in-kernel boundary mask is statically elided.
    """
    budget = int(_vmem_limit_bytes() * 0.80)

    # Row tile: big enough that weight re-streaming stays below the roofline.
    tm = min(768, _round_up(BT, 8))
    # Keep >= 2 row tiles when BT is big enough so the "parallel" row axis can
    # be split across TensorCores (v7x megacore).
    if BT >= 256 and pl.cdiv(BT, tm) < 2:
        tm = max(8, _round_up(pl.cdiv(BT, 2), 8))

    # Vocab tile: largest multiple of 128 <= 2048 that divides V if possible.
    v128 = _round_up(V, 128)
    tv = None
    for cand in (2048, 1536, 1024, 768, 512, 384, 256, 128):
        if cand <= v128 and V % cand == 0:
            tv = cand
            break
    if tv is None:
        tv = min(1024, v128)

    def fits(tm_, tv_):
        x_t = 2 * tm_ * H * itemsize          # double-buffered x tile
        w_t = 2 * tv_ * H * itemsize          # double-buffered weight tile
        b_t = 2 * tv_ * 4                     # bias tile (f32)
        inter = 5 * tm_ * tv_ * 4             # f32 logits / exp / mask temps
        misc = 16 * tm_ * 4 + (1 << 20)       # targets / out / scratch / slack
        return x_t + w_t + b_t + inter + misc <= budget

    while not fits(tm, tv) and (tm > 8 or tv > 128):
        w_side = 2 * tv * H * itemsize
        x_side = 2 * tm * H * itemsize
        if tv > 128 and (w_side >= x_side or tm <= 8):
            tv = max(128, (tv // 2) // 128 * 128)   # stay a multiple of 128
        else:
            tm = max(8, _round_up(tm // 2, 8))
    return tm, tv


# ---------------------------------------------------------------------------
# Kernel
# ---------------------------------------------------------------------------

def _flce_kernel(x_ref, w_ref, b_ref, tgt_ref, loss_ref,
                 m_sc, d_sc, xy_sc, sx_sc,
                 *, label_smoothing, ignore_index, vocab_size, tv, needs_mask):
    j = pl.program_id(1)

    @pl.when(j == 0)
    def _():
        m_sc[...] = jnp.full_like(m_sc, -jnp.inf)
        d_sc[...] = jnp.zeros_like(d_sc)
        xy_sc[...] = jnp.zeros_like(xy_sc)
        if label_smoothing > 0:
            sx_sc[...] = jnp.zeros_like(sx_sc)

    # logits tile: (tm, tv) = x (tm, H) . weight_tile (tv, H) contracted on H.
    # Native-dtype inputs (e.g. bf16) on the MXU, f32 accumulation, no
    # in-kernel transpose of the weight tile.
    logits = jax.lax.dot_general(
        x_ref[...], w_ref[...],
        dimension_numbers=(((1,), (1,)), ((), ())),
        preferred_element_type=jnp.float32)
    logits = logits + b_ref[...]  # (1, tv) broadcasts over rows

    tm = logits.shape[0]
    col = j * tv + jax.lax.broadcasted_iota(jnp.int32, (tm, tv), 1)
    tgt = tgt_ref[...]  # (tm, 1) int32

    if needs_mask:
        valid = col < vocab_size
        logits_m = jnp.where(valid, logits, -jnp.inf)
    else:
        logits_m = logits

    # Online softmax statistics (per row, f32 scratch).
    block_max = jnp.max(logits_m, axis=-1, keepdims=True)
    m_prev = m_sc[...]
    m_new = jnp.maximum(m_prev, block_max)
    d_sc[...] = d_sc[...] * jnp.exp(m_prev - m_new) + jnp.sum(
        jnp.exp(logits_m - m_new), axis=-1, keepdims=True)
    m_sc[...] = m_new

    # Gather the logit at the target column via masked sum.
    xy_sc[...] += jnp.sum(jnp.where(col == tgt, logits, 0.0),
                          axis=-1, keepdims=True)

    # Label-smoothing accumulator sum(-eps * logits), only if enabled.
    if label_smoothing > 0:
        eps = label_smoothing / vocab_size
        contrib = -eps * logits
        if needs_mask:
            contrib = jnp.where(valid, contrib, 0.0)
        sx_sc[...] += jnp.sum(contrib, axis=-1, keepdims=True)

    @pl.when(j == pl.num_programs(1) - 1)
    def _():
        lse = m_sc[...] + jnp.log(d_sc[...])
        loss = lse - xy_sc[...]
        if label_smoothing > 0:
            smooth = sx_sc[...] + label_smoothing * lse
            loss = loss * (1.0 - label_smoothing) + smooth
        loss = jnp.where(tgt == ignore_index, 0.0, loss)
        loss_ref[...] = loss


# ---------------------------------------------------------------------------
# Wrapper
# ---------------------------------------------------------------------------

def fused_linear_cross_entropy_loss(x, target, weight, bias=None,
                                    ignore_index=-100, label_smoothing=0.0,
                                    tm=None, tv=None):
    """Mean (over non-ignored rows) cross-entropy of x @ weight.T + bias,
    without materializing the [BT, V] logits in HBM."""
    BT, H = x.shape
    V = weight.shape[0]

    if weight.dtype != x.dtype:
        weight = weight.astype(x.dtype)

    if tm is None or tv is None:
        tm_auto, tv_auto = _auto_tiles(BT, H, V, jnp.dtype(x.dtype).itemsize)
        tm = int(tm) if tm is not None else tm_auto
        tv = int(tv) if tv is not None else tv_auto
    tm, tv = int(tm), int(tv)

    if bias is None:
        bias2d = jnp.zeros((1, V), jnp.float32)
    else:
        bias2d = bias.reshape(1, V).astype(jnp.float32)

    # Only the tiny target vector is padded; padded rows carry ignore_index so
    # the kernel zeroes their loss. x / weight / bias stream unpadded; ragged
    # edge blocks are masked inside the kernel.
    BT_p = pl.cdiv(BT, tm) * tm
    tgt_p = jnp.full((BT_p, 1), ignore_index, jnp.int32)
    tgt_p = tgt_p.at[:BT, 0].set(target.astype(jnp.int32))

    n_row_tiles = BT_p // tm
    grid = (n_row_tiles, pl.cdiv(V, tv))
    needs_mask = (V % tv) != 0

    kernel = functools.partial(
        _flce_kernel,
        label_smoothing=float(label_smoothing),
        ignore_index=int(ignore_index),
        vocab_size=int(V),
        tv=tv,
        needs_mask=bool(needs_mask),
    )

    itemsize = jnp.dtype(x.dtype).itemsize
    cost = pl.CostEstimate(
        flops=2 * BT * V * H,
        transcendentals=BT * V,
        bytes_accessed=(BT * H * itemsize                       # x (once)
                        + V * H * itemsize * n_row_tiles        # weight streams
                        + V * 4 + BT_p * 4 + BT_p * 4))         # bias/tgt/out

    loss_2d = pl.pallas_call(
        kernel,
        out_shape=jax.ShapeDtypeStruct((BT_p, 1), jnp.float32),
        grid_spec=pltpu.PrefetchScalarGridSpec(
            num_scalar_prefetch=0,
            grid=grid,
            in_specs=[
                pl.BlockSpec((tm, H), lambda i, j: (i, 0)),   # x rows
                pl.BlockSpec((tv, H), lambda i, j: (j, 0)),   # weight vocab tile
                pl.BlockSpec((1, tv), lambda i, j: (0, j)),   # bias vocab tile
                pl.BlockSpec((tm, 1), lambda i, j: (i, 0)),   # targets
            ],
            out_specs=pl.BlockSpec((tm, 1), lambda i, j: (i, 0)),
            scratch_shapes=[pltpu.VMEM((tm, 1), jnp.float32)] * 4,
        ),
        compiler_params=pltpu.CompilerParams(
            dimension_semantics=("parallel", "arbitrary"),
            vmem_limit_bytes=_vmem_limit_bytes()),
        cost_estimate=cost,
    )(x, weight, bias2d, tgt_p)

    # Padded / ignored rows are already zero, so sum everything.
    n_non_ignore = jnp.sum(target != ignore_index).astype(jnp.float32)
    return jnp.sum(loss_2d) / n_non_ignore


class FusedLinearCrossEntropyLoss:
    """JAX/Pallas port of fla.modules.FusedLinearCrossEntropyLoss (forward)."""

    def __init__(self, ignore_index: int = -100, label_smoothing: float = 0.0):
        self.ignore_index = ignore_index
        self.label_smoothing = label_smoothing

    def __call__(self, x, target, weight, bias=None):
        return fused_linear_cross_entropy_loss(
            x, target, weight, bias,
            ignore_index=self.ignore_index,
            label_smoothing=self.label_smoothing)


# ---------------------------------------------------------------------------
# Reference + test
# ---------------------------------------------------------------------------

def _reference_loss(x, target, weight, bias, ignore_index, label_smoothing):
    logits = x.astype(jnp.float32) @ weight.astype(jnp.float32).T + bias
    V = weight.shape[0]
    m = jnp.max(logits, axis=-1)
    lse = m + jnp.log(jnp.sum(jnp.exp(logits - m[:, None]), axis=-1))
    safe_t = jnp.clip(target, 0, V - 1)
    xy = jnp.take_along_axis(logits, safe_t[:, None], axis=-1)[:, 0]
    loss = -(xy - lse)
    if label_smoothing > 0:
        eps = label_smoothing / V
        smooth = -eps * jnp.sum(logits, axis=-1) + label_smoothing * lse
        loss = loss * (1.0 - label_smoothing) + smooth
    mask = target != ignore_index
    loss = jnp.where(mask, loss, 0.0)
    return jnp.sum(loss) / jnp.sum(mask).astype(jnp.float32)


if __name__ == "__main__":
    key = jax.random.PRNGKey(0)
    k_x, k_w, k_b, k_t = jax.random.split(key, 4)

    ignore_index = -100
    ok = True

    # Case 1: tile-aligned shapes, auto tile selection, f32.
    BT, H, V = 16, 64, 256
    x = jax.random.normal(k_x, (BT, H), jnp.float32)
    weight = jax.random.normal(k_w, (V, H), jnp.float32) * 0.02
    bias = jax.random.normal(k_b, (V,), jnp.float32) * 0.01
    target = jax.random.randint(k_t, (BT,), 0, V, jnp.int32)
    target = target.at[3].set(ignore_index).at[10].set(ignore_index)

    for ls in (0.0, 0.1):
        mod = FusedLinearCrossEntropyLoss(ignore_index=ignore_index,
                                          label_smoothing=ls)
        loss = jax.block_until_ready(mod(x, target, weight, bias))
        ref = _reference_loss(x, target, weight, bias, ignore_index, ls)
        if not jnp.allclose(loss, ref, rtol=1e-5, atol=1e-5):
            ok = False

    # Case 2: ragged rows / vocab (exercises boundary masking), explicit tiles.
    BT2, H2, V2 = 20, 64, 200
    x2 = jax.random.normal(k_x, (BT2, H2), jnp.float32)
    w2 = jax.random.normal(k_w, (V2, H2), jnp.float32) * 0.02
    t2 = jax.random.randint(k_t, (BT2,), 0, V2, jnp.int32).at[0].set(ignore_index)
    loss2 = jax.block_until_ready(
        fused_linear_cross_entropy_loss(
            x2, t2, w2, None, ignore_index=ignore_index,
            label_smoothing=0.1, tm=8, tv=128))
    ref2 = _reference_loss(x2, t2, w2, jnp.zeros((V2,), jnp.float32),
                           ignore_index, 0.1)
    if not jnp.allclose(loss2, ref2, rtol=1e-5, atol=1e-5):
        ok = False

    # Case 3: bf16 inputs (native-dtype MXU path), auto tiles.
    BT3, H3, V3 = 32, 64, 256
    x3 = jax.random.normal(k_x, (BT3, H3), jnp.float32).astype(jnp.bfloat16)
    w3 = (jax.random.normal(k_w, (V3, H3), jnp.float32) * 0.02).astype(jnp.bfloat16)
    t3 = jax.random.randint(k_t, (BT3,), 0, V3, jnp.int32).at[5].set(ignore_index)
    loss3 = jax.block_until_ready(
        fused_linear_cross_entropy_loss(x3, t3, w3, None,
                                        ignore_index=ignore_index))
    ref3 = _reference_loss(x3, t3, w3, jnp.zeros((V3,), jnp.float32),
                           ignore_index, 0.0)
    if not jnp.allclose(loss3, ref3, rtol=5e-2, atol=5e-2):
        ok = False

    # TODO(synk): backward pass (dx/dw/db precomputed in the Triton forward
    # and the element_mul_kernel rescale) is not implemented; only the forward
    # scalar loss is computed here.
    print("KERNEL_OK" if ok else "KERNEL_MISMATCH")
</pallas_src>

<mosaic_0001>
module attributes {stable_mosaic.version = 11 : i64} {
  func.func @_flce_kernel(%arg0: i32, %arg1: i32, %arg2: memref<16x64xf32, #tpu.memory_space<vmem>>, %arg3: memref<256x64xf32, #tpu.memory_space<vmem>>, %arg4: memref<1x256xf32, #tpu.memory_space<vmem>>, %arg5: memref<16x1xi32, #tpu.memory_space<vmem>>, %arg6: memref<16x1xf32, #tpu.memory_space<vmem>>, %arg7: memref<16x1xf32, #tpu.memory_space<vmem>>, %arg8: memref<16x1xf32, #tpu.memory_space<vmem>>, %arg9: memref<16x1xf32, #tpu.memory_space<vmem>>, %arg10: memref<16x1xf32, #tpu.memory_space<vmem>>) attributes {dimension_semantics = [#tpu.dimension_semantics<parallel>, #tpu.dimension_semantics<arbitrary>], iteration_bounds = array<i64: 1, 1>, scalar_prefetch = 0 : i64, scratch_operands = 4 : i64, tpu.core_type = #tpu.core_type<tc>, window_params = [{transform_indices = @transform_0, window_bounds = array<i64: 16, 64>}, {transform_indices = @transform_1, window_bounds = array<i64: 256, 64>}, {transform_indices = @transform_2, window_bounds = array<i64: 1, 256>}, {transform_indices = @transform_3, window_bounds = array<i64: 16, 1>}, {transform_indices = @transform_4, window_bounds = array<i64: 16, 1>}]} {
    %c0_i32 = arith.constant 0 : i32
    %0 = arith.cmpi eq, %arg1, %c0_i32 : i32
    %1 = arith.extui %0 : i1 to i32
    %c0_i32_0 = arith.constant 0 : i32
    %2 = arith.cmpi ne, %1, %c0_i32_0 : i32
    scf.if %2 {
      %cst_26 = arith.constant 0xFF800000 : f32
      %42 = vector.broadcast %cst_26 : f32 to vector<16x1xf32>
      %c0_27 = arith.constant 0 : index
      %c0_28 = arith.constant 0 : index
      %43 = vector.load %arg7[%c0_27, %c0_28] : memref<16x1xf32, #tpu.memory_space<vmem>>, vector<16x1xf32>
      tpu.vector_store %arg7[%c0_27, %c0_28], %42 {strides = array<i32>} : memref<16x1xf32, #tpu.memory_space<vmem>>, vector<16x1xf32>,
      %cst_29 = arith.constant 0.000000e+00 : f32
      %44 = vector.broadcast %cst_29 : f32 to vector<16x1xf32>
      %c0_30 = arith.constant 0 : index
      %c0_31 = arith.constant 0 : index
      %45 = vector.load %arg8[%c0_30, %c0_31] : memref<16x1xf32, #tpu.memory_space<vmem>>, vector<16x1xf32>
      tpu.vector_store %arg8[%c0_30, %c0_31], %44 {strides = array<i32>} : memref<16x1xf32, #tpu.memory_space<vmem>>, vector<16x1xf32>,
      %cst_32 = arith.constant 0.000000e+00 : f32
      %46 = vector.broadcast %cst_32 : f32 to vector<16x1xf32>
      %c0_33 = arith.constant 0 : index
      %c0_34 = arith.constant 0 : index
      %47 = vector.load %arg9[%c0_33, %c0_34] : memref<16x1xf32, #tpu.memory_space<vmem>>, vector<16x1xf32>
      tpu.vector_store %arg9[%c0_33, %c0_34], %46 {strides = array<i32>} : memref<16x1xf32, #tpu.memory_space<vmem>>, vector<16x1xf32>,
    } else {
    }
    %c0 = arith.constant 0 : index
    %c0_1 = arith.constant 0 : index
    %3 = vector.load %arg2[%c0, %c0_1] : memref<16x64xf32, #tpu.memory_space<vmem>>, vector<16x64xf32>
    %c0_2 = arith.constant 0 : index
    %c0_3 = arith.constant 0 : index
    %4 = vector.load %arg3[%c0_2, %c0_3] : memref<256x64xf32, #tpu.memory_space<vmem>>, vector<256x64xf32>
    %cst = arith.constant dense<0.000000e+00> : vector<16x256xf32>
    %5 = tpu.matmul %3, %4, %cst {dimension_numbers = #tpu.dot_dimension_numbers<[1], [1], [0], [0], [0, 0, 1, 0], [], []>} : vector<16x64xf32>, vector<256x64xf32>, vector<16x256xf32> -> vector<16x256xf32>
    %c0_4 = arith.constant 0 : index
    %c0_5 = arith.constant 0 : index
    %6 = vector.load %arg4[%c0_4, %c0_5] : memref<1x256xf32, #tpu.memory_space<vmem>>, vector<1x256xf32>
    %7 = vector.broadcast %6 : vector<1x256xf32> to vector<16x256xf32>
    %8 = arith.addf %5, %7 : vector<16x256xf32>
    %c256_i32 = arith.constant 256 : i32
    %9 = arith.muli %arg1, %c256_i32 : i32
    %10 = tpu.iota {dimensions = array<i32: 1>} : vector<16x256xi32>
    %11 = vector.broadcast %9 : i32 to vector<16x256xi32>
    %12 = arith.addi %11, %10 : vector<16x256xi32>
    %c0_6 = arith.constant 0 : index
    %c0_7 = arith.constant 0 : index
    %13 = vector.load %arg5[%c0_6, %c0_7] : memref<16x1xi32, #tpu.memory_space<vmem>>, vector<16x1xi32>
    %cst_8 = arith.constant dense<0xFF800000> : vector<16xf32>
    %14 = vector.multi_reduction <maximumf>, %8, %cst_8 [1] : vector<16x256xf32> to vector<16xf32>
    %15 = vector.shape_cast %14 : vector<16xf32> to vector<16x1xf32>
    %c0_9 = arith.constant 0 : index
    %c0_10 = arith.constant 0 : index
    %16 = vector.load %arg7[%c0_9, %c0_10] : memref<16x1xf32, #tpu.memory_space<vmem>>, vector<16x1xf32>
    %17 = arith.maximumf %16, %15 : vector<16x1xf32>
    %c0_11 = arith.constant 0 : index
    %c0_12 = arith.constant 0 : index
    %18 = vector.load %arg8[%c0_11, %c0_12] : memref<16x1xf32, #tpu.memory_space<vmem>>, vector<16x1xf32>
    %19 = arith.subf %16, %17 : vector<16x1xf32>
    %20 = math.exp %19 : vector<16x1xf32>
    %21 = arith.mulf %18, %20 : vector<16x1xf32>
    %22 = vector.broadcast %17 : vector<16x1xf32> to vector<16x256xf32>
    %23 = arith.subf %8, %22 : vector<16x256xf32>
    %24 = math.exp %23 : vector<16x256xf32>
    %cst_13 = arith.constant dense<0.000000e+00> : vector<16xf32>
    %25 = vector.multi_reduction <add>, %24, %cst_13 [1] : vector<16x256xf32> to vector<16xf32>
    %26 = vector.shape_cast %25 : vector<16xf32> to vector<16x1xf32>
    %27 = arith.addf %21, %26 : vector<16x1xf32>
    %c0_14 = arith.constant 0 : index
    %c0_15 = arith.constant 0 : index
    %28 = vector.load %arg8[%c0_14, %c0_15] : memref<16x1xf32, #tpu.memory_space<vmem>>, vector<16x1xf32>
    tpu.vector_store %arg8[%c0_14, %c0_15], %27 {strides = array<i32>} : memref<16x1xf32, #tpu.memory_space<vmem>>, vector<16x1xf32>,
    %c0_16 = arith.constant 0 : index
    %c0_17 = arith.constant 0 : index
    %29 = vector.load %arg7[%c0_16, %c0_17] : memref<16x1xf32, #tpu.memory_space<vmem>>, vector<16x1xf32>
    tpu.vector_store %arg7[%c0_16, %c0_17], %17 {strides = array<i32>} : memref<16x1xf32, #tpu.memory_space<vmem>>, vector<16x1xf32>,
    %c0_18 = arith.constant 0 : index
    %c0_19 = arith.constant 0 : index
    %30 = vector.load %arg9[%c0_18, %c0_19] : memref<16x1xf32, #tpu.memory_space<vmem>>, vector<16x1xf32>
    %31 = vector.broadcast %13 : vector<16x1xi32> to vector<16x256xi32>
    %32 = arith.cmpi eq, %12, %31 : vector<16x256xi32>
    %cst_20 = arith.constant 0.000000e+00 : f32
    %33 = vector.broadcast %cst_20 : f32 to vector<16x256xf32>
    %34 = arith.select %32, %8, %33 : vector<16x256xi1>, vector<16x256xf32>
    %cst_21 = arith.constant dense<0.000000e+00> : vector<16xf32>
    %35 = vector.multi_reduction <add>, %34, %cst_21 [1] : vector<16x256xf32> to vector<16xf32>
    %36 = vector.shape_cast %35 : vector<16xf32> to vector<16x1xf32>
    %37 = arith.addf %30, %36 : vector<16x1xf32>
    %c0_22 = arith.constant 0 : index
    %c0_23 = arith.constant 0 : index
    %38 = vector.load %arg9[%c0_22, %c0_23] : memref<16x1xf32, #tpu.memory_space<vmem>>, vector<16x1xf32>
    tpu.vector_store %arg9[%c0_22, %c0_23], %37 {strides = array<i32>} : memref<16x1xf32, #tpu.memory_space<vmem>>, vector<16x1xf32>,
    %c0_i32_24 = arith.constant 0 : i32
    %39 = arith.cmpi eq, %arg1, %c0_i32_24 : i32
    %40 = arith.extui %39 : i1 to i32
    %c0_i32_25 = arith.constant 0 : i32
    %41 = arith.cmpi ne, %40, %c0_i32_25 : i32
    scf.if %41 {
      %c0_26 = arith.constant 0 : index
      %c0_27 = arith.constant 0 : index
      %42 = vector.load %arg7[%c0_26, %c0_27] : memref<16x1xf32, #tpu.memory_space<vmem>>, vector<16x1xf32>
      %c0_28 = arith.constant 0 : index
      %c0_29 = arith.constant 0 : index
      %43 = vector.load %arg8[%c0_28, %c0_29] : memref<16x1xf32, #tpu.memory_space<vmem>>, vector<16x1xf32>
      %44 = math.log %43 : vector<16x1xf32>
      %45 = arith.addf %42, %44 : vector<16x1xf32>
      %c0_30 = arith.constant 0 : index
      %c0_31 = arith.constant 0 : index
      %46 = vector.load %arg9[%c0_30, %c0_31] : memref<16x1xf32, #tpu.memory_space<vmem>>, vector<16x1xf32>
      %47 = arith.subf %45, %46 : vector<16x1xf32>
      %c-100_i32 = arith.constant -100 : i32
      %48 = vector.broadcast %c-100_i32 : i32 to vector<16x1xi32>
      %49 = arith.cmpi eq, %13, %48 : vector<16x1xi32>
      %cst_32 = arith.constant 0.000000e+00 : f32
      %50 = vector.broadcast %cst_32 : f32 to vector<16x1xf32>
      %51 = arith.select %49, %50, %47 : vector<16x1xi1>, vector<16x1xf32>
      %c0_33 = arith.constant 0 : index
      %c0_34 = arith.constant 0 : index
      %52 = vector.load %arg6[%c0_33, %c0_34] : memref<16x1xf32, #tpu.memory_space<vmem>>, vector<16x1xf32>
      tpu.vector_store %arg6[%c0_33, %c0_34], %51 {strides = array<i32>} : memref<16x1xf32, #tpu.memory_space<vmem>>, vector<16x1xf32>,
    } else {
    }
    return
  }
  func.func @transform_0(%arg0: i32, %arg1: i32) -> (i32, i32) {
    %c0_i32 = arith.constant 0 : i32
    %c0_i32_0 = arith.constant 0 : i32
    return %arg0, %c0_i32 : i32, i32
  }
  func.func @transform_1(%arg0: i32, %arg1: i32) -> (i32, i32) {
    %c0_i32 = arith.constant 0 : i32
    %c0_i32_0 = arith.constant 0 : i32
    return %arg1, %c0_i32 : i32, i32
  }
  func.func @transform_2(%arg0: i32, %arg1: i32) -> (i32, i32) {
    %c0_i32 = arith.constant 0 : i32
    %c0_i32_0 = arith.constant 0 : i32
    return %c0_i32, %arg1 : i32, i32
  }
  func.func @transform_3(%arg0: i32, %arg1: i32) -> (i32, i32) {
    %c0_i32 = arith.constant 0 : i32
    %c0_i32_0 = arith.constant 0 : i32
    return %arg0, %c0_i32 : i32, i32
  }
  func.func @transform_4(%arg0: i32, %arg1: i32) -> (i32, i32) {
    %c0_i32 = arith.constant 0 : i32
    %c0_i32_0 = arith.constant 0 : i32
    return %arg0, %c0_i32 : i32, i32
  }
}

</mosaic_0001>

<llo_original>
// kernel: tpu_custom_call.1
$region0: #{tpu_custom_call.1}
  #allocation0 [shape = 'u32[]', space=smem, size = 0x4, offset = 0x4, fixed_abs, tag = 'smem constant byte address 0x4 - core index']
  #allocation1 [shape = 'u32[144,128]{1,0:T(1,128)}', space=vmem, size = 0x12000, scoped, tag = 'internal scratch']
  #allocation2 [shape = 'f32[16,1]{1,0:T(8,128)}', space=vmem, size = 0x2000, scoped, tag = 'scratch operand']
  #allocation3 [shape = 'f32[16,1]{1,0:T(8,128)}', space=vmem, size = 0x2000, scoped, tag = 'scratch operand']
  #allocation4 [shape = 'f32[16,1]{1,0:T(8,128)}', space=vmem, size = 0x2000, scoped, tag = 'scratch operand']
  #allocation5 [shape = 'f32[16,1]{1,0:T(8,128)}', space=vmem, size = 0x2000, scoped, tag = 'scratch operand']
  %s0 = inlined_call_operand.vmem [shape: f32[16,64], index: 0, kind: input, shape index: {}]
  %s1 = inlined_call_operand.vmem [shape: f32[256,64], index: 1, kind: input, shape index: {}]
  %s2 = inlined_call_operand.vmem [shape: f32[1,256], index: 2, kind: input, shape index: {}]
  %s3 = inlined_call_operand.vmem [shape: s32[16,1], index: 3, kind: input, shape index: {}]
  %s4 = inlined_call_operand.vmem [shape: f32[16,1], index: 4, kind: output, shape index: {}]
  %s5 = sld [smem:[#allocation0]]
  $region34: #{tpu_custom_call.1} parent=0
    _
  %s7 = ssub.s32 1, %s5
  %s8 = scalar_select 0, %s7, %s5
  // Predicated region
  $region2: #{tpu_custom_call.1} parent=0 // pred_check
    _
  $region3: #{tpu_custom_call.1} parent=0 // pred_check_branch
    %10 = sbr.rel (0) target = $region5
  $region4: #{tpu_custom_call.1} parent=0 // pred_region
    _
  $region5: #{tpu_custom_call.1} parent=0 // pred_fallthru
    _
  // Predicated region
  $region6: #{tpu_custom_call.1} parent=0 // pred_check
    _
  $region7: #{tpu_custom_call.1} parent=0 // pred_check_branch
    %12 = sbr.rel (0) target = $region9
  $region8: #{tpu_custom_call.1} parent=0 // pred_region
    _
  $region9: #{tpu_custom_call.1} parent=0 // pred_fallthru
    _
  // Predicated region
  $region10: #{tpu_custom_call.1} parent=0 // pred_check
    _
  $region11: #{tpu_custom_call.1} parent=0 // pred_check_branch
    %14 = sbr.rel (0) target = $region13
  $region12: #{tpu_custom_call.1} parent=0 // pred_region
    _
  $region13: #{tpu_custom_call.1} parent=0 // pred_fallthru
    _
  // Predicated region
  $region14: #{tpu_custom_call.1} parent=0 // pred_check
    _
  $region15: #{tpu_custom_call.1} parent=0 // pred_check_branch
    %16 = sbr.rel (0) target = $region17
  $region16: #{tpu_custom_call.1} parent=0 // pred_region
    _
  $region17: #{tpu_custom_call.1} parent=0 // pred_fallthru
    _
  %p17 = scmp.eq.s32.totalorder 0, 0
  // Predicated region
  $region18: #{tpu_custom_call.1} parent=0 // pred_check
    %p18 = pneg %p17
  $region19: #{tpu_custom_call.1} parent=0 // pred_check_branch
    %20 = sbr.rel (%p18) target = $region21
  $region20: #{tpu_custom_call.1} parent=0 // pred_region
    %vm21 = vcmask 7168
    %22 = vst.msk [vmem:[#allocation2] sm:$0xff] %vm21, -inf
    %23 = vst.msk [vmem:[#allocation2 + $0x8] sm:$0xff] %vm21, -inf
    %24 = vst.msk [vmem:[#allocation3] sm:$0xff] %vm21, 0.0
    %25 = vst.msk [vmem:[#allocation3 + $0x8] sm:$0xff] %vm21, 0.0
    %26 = vst.msk [vmem:[#allocation4] sm:$0xff] %vm21, 0.0
    %27 = vst.msk [vmem:[#allocation4 + $0x8] sm:$0xff] %vm21, 0.0
  $region21: #{tpu_custom_call.1} parent=0 // pred_fallthru
    _
  %v28 = vld [vmem:[%s0] sm:$0xff]
  %v29 = vld [vmem:[%s0 + $0x8] sm:$0xff]
  %v30 = vld [vmem:[%s1] sm:$0xff]
  %v31 = vld [vmem:[%s1 + $0x8] sm:$0xff]
  %v32 = vld [vmem:[%s1 + $0x10] sm:$0xff]
  %v33 = vld [vmem:[%s1 + $0x18] sm:$0xff]
  %v34 = vld [vmem:[%s1 + $0x20] sm:$0xff]
  %v35 = vld [vmem:[%s1 + $0x28] sm:$0xff]
  %v36 = vld [vmem:[%s1 + $0x30] sm:$0xff]
  %v37 = vld [vmem:[%s1 + $0x38] sm:$0xff]
  %v38 = vld [vmem:[%s1 + $0x40] sm:$0xff]
  %v39 = vld [vmem:[%s1 + $0x48] sm:$0xff]
  %v40 = vld [vmem:[%s1 + $0x50] sm:$0xff]
  %v41 = vld [vmem:[%s1 + $0x58] sm:$0xff]
  %v42 = vld [vmem:[%s1 + $0x60] sm:$0xff]
  %v43 = vld [vmem:[%s1 + $0x68] sm:$0xff]
  %v44 = vld [vmem:[%s1 + $0x70] sm:$0xff]
  %v45 = vld [vmem:[%s1 + $0x78] sm:$0xff]
  %v46 = vld [vmem:[%s1 + $0x80] sm:$0xff]
  %v47 = vld [vmem:[%s1 + $0x88] sm:$0xff]
  %v48 = vld [vmem:[%s1 + $0x90] sm:$0xff]
  %v49 = vld [vmem:[%s1 + $0x98] sm:$0xff]
  %v50 = vld [vmem:[%s1 + $0xa0] sm:$0xff]
  %v51 = vld [vmem:[%s1 + $0xa8] sm:$0xff]
  %v52 = vld [vmem:[%s1 + $0xb0] sm:$0xff]
  %v53 = vld [vmem:[%s1 + $0xb8] sm:$0xff]
  %v54 = vld [vmem:[%s1 + $0xc0] sm:$0xff]
  %v55 = vld [vmem:[%s1 + $0xc8] sm:$0xff]
  %v56 = vld [vmem:[%s1 + $0xd0] sm:$0xff]
  %v57 = vld [vmem:[%s1 + $0xd8] sm:$0xff]
  %v58 = vld [vmem:[%s1 + $0xe0] sm:$0xff]
  %v59 = vld [vmem:[%s1 + $0xe8] sm:$0xff]
  %v60 = vld [vmem:[%s1 + $0xf0] sm:$0xff]
  %v61 = vld [vmem:[%s1 + $0xf8] sm:$0xff]
  %v62 = vld [vmem:[%s2] sm:$0x3]
  %v64 = vlaneseq
  %v65 = vshrl.u32 %v64, 7
  %v66 = vsub.s32 0, %v65
  %v67 = vrot.slane %v62, %v66
  %v68 = vlaneseq
  %v69 = vshrl.u32 %v68, 7
  %v70 = vsub.s32 1, %v69
  %v71 = vrot.slane %v62, %v70
  %vm74 = vcmask 523264
  %v76 = vsel %vm74, %v28, 0
  %v79 = vsel %vm74, %v29, 0
  %v82 = vsel %vm74, %v30, 0
  %v85 = vsel %vm74, %v31, 0
  %v88 = vsel %vm74, %v32, 0
  %v91 = vsel %vm74, %v33, 0
  %v94 = vsel %vm74, %v34, 0
  %v97 = vsel %vm74, %v35, 0
  %v100 = vsel %vm74, %v36, 0
  %v103 = vsel %vm74, %v37, 0
  %v106 = vsel %vm74, %v38, 0
  %v109 = vsel %vm74, %v39, 0
  %v112 = vsel %vm74, %v40, 0
  %v115 = vsel %vm74, %v41, 0
  %v118 = vsel %vm74, %v42, 0
  %v121 = vsel %vm74, %v43, 0
  %v124 = vsel %vm74, %v44, 0
  %v127 = vsel %vm74, %v45, 0
  %v130 = vsel %vm74, %v46, 0
  %v133 = vsel %vm74, %v47, 0
  %v136 = vsel %vm74, %v48, 0
  %v139 = vsel %vm74, %v49, 0
  %v142 = vsel %vm74, %v50, 0
  %v145 = vsel %vm74, %v51, 0
  %v148 = vsel %vm74, %v52, 0
  %v151 = vsel %vm74, %v53, 0
  %v154 = vsel %vm74, %v54, 0
  %v157 = vsel %vm74, %v55, 0
  %v160 = vsel %vm74, %v56, 0
  %v163 = vsel %vm74, %v57, 0
  %v166 = vsel %vm74, %v58, 0
  %v169 = vsel %vm74, %v59, 0
  %v172 = vsel %vm74, %v60, 0
  %v175 = vsel %vm74, %v61, 0
  %177 = vmatprep.subr.mxu0 0.0
  %178 = vmatpush1.xpose.msra.mxu0 %v127
  %179 = vmatprep.subr.mxu0 0.0
  %180 = vmatpush1.xpose.msra.mxu0 %v124
  %181 = vmatprep.subr.mxu0 0.0
  %182 = vmatpush1.xpose.msra.mxu0 %v121
  %183 = vmatprep.subr.mxu0 0.0
  %184 = vmatpush1.xpose.msra.mxu0 %v118
  %185 = vmatprep.subr.mxu0 0.0
  %186 = vmatpush1.xpose.msra.mxu0 %v115
  %187 = vmatprep.subr.mxu0 0.0
  %188 = vmatpush1.xpose.msra.mxu0 %v112
  %189 = vmatprep.subr.mxu0 0.0
  %190 = vmatpush1.xpose.msra.mxu0 %v109
  %191 = vmatprep.subr.mxu0 0.0
  %192 = vmatpush1.xpose.msra.mxu0 %v106
  %193 = vmatprep.subr.mxu0 0.0
  %194 = vmatpush1.xpose.msra.mxu0 %v103
  %195 = vmatprep.subr.mxu0 0.0
  %196 = vmatpush1.xpose.msra.mxu0 %v100
  %197 = vmatprep.subr.mxu0 0.0
  %198 = vmatpush1.xpose.msra.mxu0 %v97
  %199 = vmatprep.subr.mxu0 0.0
  %200 = vmatpush1.xpose.msra.mxu0 %v94
  %201 = vmatprep.subr.mxu0 0.0
  %202 = vmatpush1.xpose.msra.mxu0 %v91
  %203 = vmatprep.subr.mxu0 0.0
  %204 = vmatpush1.xpose.msra.mxu0 %v88
  %205 = vmatprep.subr.mxu0 0.0
  %206 = vmatpush1.xpose.msra.mxu0 %v85
  %207 = vmatprep.subr.mxu0 0.0
  %208 = vmatpush1.xpose.msra.mxu0 %v82
  %209 = vmatprep.subr.mxu0 0.0
  %210 = vmatpush2.xpose.msra.mxu0 %v175
  %211 = vmatprep.subr.mxu0 0.0
  %212 = vmatpush2.xpose.msra.mxu0 %v172
  %213 = vmatprep.subr.mxu0 0.0
  %214 = vmatpush2.xpose.msra.mxu0 %v169
  %215 = vmatprep.subr.mxu0 0.0
  %216 = vmatpush2.xpose.msra.mxu0 %v166
  %217 = vmatprep.subr.mxu0 0.0
  %218 = vmatpush2.xpose.msra.mxu0 %v163
  %219 = vmatprep.subr.mxu0 0.0
  %220 = vmatpush2.xpose.msra.mxu0 %v160
  %221 = vmatprep.subr.mxu0 0.0
  %222 = vmatpush2.xpose.msra.mxu0 %v157
  %223 = vmatprep.subr.mxu0 0.0
  %224 = vmatpush2.xpose.msra.mxu0 %v154
  %225 = vmatprep.subr.mxu0 0.0
  %226 = vmatpush2.xpose.msra.mxu0 %v151
  %227 = vmatprep.subr.mxu0 0.0
  %228 = vmatpush2.xpose.msra.mxu0 %v148
  %229 = vmatprep.subr.mxu0 0.0
  %230 = vmatpush2.xpose.msra.mxu0 %v145
  %231 = vmatprep.subr.mxu0 0.0
  %232 = vmatpush2.xpose.msra.mxu0 %v142
  %233 = vmatprep.subr.mxu0 0.0
  %234 = vmatpush2.xpose.msra.mxu0 %v139
  %235 = vmatprep.subr.mxu0 0.0
  %236 = vmatpush2.xpose.msra.mxu0 %v136
  %237 = vmatprep.subr.mxu0 0.0
  %238 = vmatpush2.xpose.msra.mxu0 %v133
  %239 = vmatprep.subr.mxu0 0.0
  %240 = vmatpush2.xpose.msra.mxu0 %v130
  %241 = vmatprep.mubr.f32.mxu0 0.0
  %242 = vmatmul.mubr.f32.gmra.mxu0 %v76
  %v243 = vpop.f32.mrf.mxu0
  %v244 = vadd.f32 %v67, %v243
  %v245 = vpop.f32.mrf.mxu0
  %v246 = vadd.f32 %v71, %v245
  %247 = vmatprep.mubr.f32.mxu0 0.0
  %248 = vmatmul.mubr.f32.gmra.mxu0 %v79
  %v249 = vpop.f32.mrf.mxu0
  %v250 = vadd.f32 %v67, %v249
  %v251 = vpop.f32.mrf.mxu0
  %v252 = vadd.f32 %v71, %v251
  %253 = vdwg.mxu0
  %s254 = smul.u32 0, 256
  %v255 = vlaneseq
  %v256 = vand.u32 %v255, 127
  %v257 = vadd.s32 %v256, 128
  %v258 = vstv %s254
  %v259 = vadd.s32 %v258, %v256
  %v260 = vadd.s32 %v258, %v257
  %v261 = vld [vmem:[%s3] sm:$0xff]
  %v262 = vld [vmem:[%s3 + $0x8] sm:$0xff]
  %v263 = vmax.f32 %v244, %v246
  %264 = vmax.xlane.f32.xlu0 %v263
  %v265 = vpop.xlane.xlu0 %264
  %v266 = vmax.f32 %v250, %v252
  %267 = vmax.xlane.f32.xlu0 %v266
  %v268 = vpop.xlane.xlu0 %267
  %v269 = vld [vmem:[#allocation2] sm:$0xff]
  %v270 = vld [vmem:[#allocation2 + $0x8] sm:$0xff]
  %v271 = vmax.f32 %v269, %v265
  %v272 = vmax.f32 %v270, %v268
  %v273 = vld [vmem:[#allocation3] sm:$0xff]
  %v274 = vld [vmem:[#allocation3 + $0x8] sm:$0xff]
  %v275 = vsub.f32 %v269, %v271
  %v276 = vsub.f32 %v270, %v272
  %v277 = vmul.f32 %v275, 1.442695
  %v278 = vpow.pop %v277
  %v279 = vmul.f32 %v276, 1.442695
  %v280 = vpow.pop %v279
  %v281 = vmul.f32 %v273, %v278
  %v282 = vmul.f32 %v274, %v280
  %284 = vset.pattern.permute.xlu0 0
  %285 = vperm.xlu0 %284, %v271
  %v286 = vpop.permute.xlu0 %285
  %289 = vset.pattern.permute.xlu0 0
  %290 = vperm.xlu0 %289, %v272
  %v291 = vpop.permute.xlu0 %290
  %v293 = vsub.f32 %v244, %v286
  %v294 = vsub.f32 %v246, %v286
  %v295 = vsub.f32 %v250, %v291
  %v296 = vsub.f32 %v252, %v291
  %v297 = vmul.f32 %v293, 1.442695
  %v298 = vpow.pop %v297
  %v299 = vmul.f32 %v294, 1.442695
  %v300 = vpow.pop %v299
  %v301 = vmul.f32 %v295, 1.442695
  %v302 = vpow.pop %v301
  %v303 = vmul.f32 %v296, 1.442695
  %v304 = vpow.pop %v303
  %v305 = vadd.f32 %v298, %v300
  %306 = vadd.xlane.f32.xlu0 %v305
  %v307 = vpop.xlane.xlu0 %306
  %v308 = vadd.f32 %v302, %v304
  %309 = vadd.xlane.f32.xlu0 %v308
  %v310 = vpop.xlane.xlu0 %309
  %v311 = vadd.f32 %v281, %v307
  %v312 = vadd.f32 %v282, %v310
  %vm313 = vcmask 7168
  %314 = vst.msk [vmem:[#allocation3] sm:$0xff] %vm313, %v311
  %315 = vst.msk [vmem:[#allocation3 + $0x8] sm:$0xff] %vm313, %v312
  %316 = vst.msk [vmem:[#allocation2] sm:$0xff] %vm313, %v271
  %317 = vst.msk [vmem:[#allocation2 + $0x8] sm:$0xff] %vm313, %v272
  %v318 = vld [vmem:[#allocation4] sm:$0xff]
  %v319 = vld [vmem:[#allocation4 + $0x8] sm:$0xff]
  %320 = vset.pattern.permute.xlu0 0
  %321 = vperm.xlu0 %320, %v261
  %v322 = vpop.permute.xlu0 %321
  %323 = vset.pattern.permute.xlu0 0
  %324 = vperm.xlu0 %323, %v262
  %v325 = vpop.permute.xlu0 %324
  %vm326 = vcmp.eq.s32.totalorder %v259, %v322
  %vm327 = vcmp.eq.s32.totalorder %v260, %v322
  %vm328 = vcmp.eq.s32.totalorder %v259, %v325
  %vm329 = vcmp.eq.s32.totalorder %v260, %v325
  %v330 = vsel %vm326, %v244, 0.0
  %v331 = vsel %vm327, %v246, 0.0
  %v332 = vsel %vm328, %v250, 0.0
  %v333 = vsel %vm329, %v252, 0.0
  %v334 = vadd.f32 %v330, %v331
  %335 = vadd.xlane.f32.xlu0 %v334
  %v336 = vpop.xlane.xlu0 %335
  %v337 = vadd.f32 %v332, %v333
  %338 = vadd.xlane.f32.xlu0 %v337
  %v339 = vpop.xlane.xlu0 %338
  %v340 = vadd.f32 %v318, %v336
  %v341 = vadd.f32 %v319, %v339
  %342 = vst.msk [vmem:[#allocation4] sm:$0xff] %vm313, %v340
  %343 = vst.msk [vmem:[#allocation4 + $0x8] sm:$0xff] %vm313, %v341
  // Predicated region
  $region22: #{tpu_custom_call.1} parent=0 // pred_check
    %p344 = pneg %p17
  $region23: #{tpu_custom_call.1} parent=0 // pred_check_branch
    %346 = sbr.rel (%p344) target = $region25
  $region24: #{tpu_custom_call.1} parent=0 // pred_region
    %v347 = vld [vmem:[#allocation2] sm:$0xff]
    %v348 = vld [vmem:[#allocation2 + $0x8] sm:$0xff]
    %v349 = vld [vmem:[#allocation3] sm:$0xff]
    %v350 = vld [vmem:[#allocation3 + $0x8] sm:$0xff]
    %v351 = vlog2.pop %v349
    %v352 = vmul.f32 %v351, 0.6931472
    %v353 = vlog2.pop %v350
    %v354 = vmul.f32 %v353, 0.6931472
    %v355 = vadd.f32 %v347, %v352
    %v356 = vadd.f32 %v348, %v354
    %v357 = vld [vmem:[#allocation4] sm:$0xff]
    %v358 = vld [vmem:[#allocation4 + $0x8] sm:$0xff]
    %v359 = vsub.f32 %v355, %v357
    %v360 = vsub.f32 %v356, %v358
    %vm361 = vcmp.eq.s32.totalorder %v261, 4294967196
    %vm362 = vcmp.eq.s32.totalorder %v262, 4294967196
    %v363 = vsel %vm361, 0.0, %v359
    %v364 = vsel %vm362, 0.0, %v360
    %365 = vst.msk [vmem:[%s4] sm:$0xff] %vm313, %v363
    %366 = vst.msk [vmem:[%s4 + $0x8] sm:$0xff] %vm313, %v364
  $region25: #{tpu_custom_call.1} parent=0 // pred_fallthru
    _
  // Predicated region
  $region26: #{tpu_custom_call.1} parent=0 // pred_check
    _
  $region27: #{tpu_custom_call.1} parent=0 // pred_check_branch
    %368 = sbr.rel (0) target = $region29
  $region28: #{tpu_custom_call.1} parent=0 // pred_region
    _
  $region29: #{tpu_custom_call.1} parent=0 // pred_fallthru
    _
  // Predicated region
  $region30: #{tpu_custom_call.1} parent=0 // pred_check
    _
  $region31: #{tpu_custom_call.1} parent=0 // pred_check_branch
    %370 = sbr.rel (0) target = $region33
  $region32: #{tpu_custom_call.1} parent=0 // pred_region
    _
  $region33: #{tpu_custom_call.1} parent=0 // pred_fallthru
    _

</llo_original>
